<compile_context>
chip_gen: v6e
topology: v6e:2x2x1
jax: 0.10.0
libtpu: 0.0.40
codegen_flags: <defaults>
</compile_context>

<pallas_src>
import functools

import jax
import jax.numpy as jnp
from jax.experimental import pallas as pl
from jax.experimental.pallas import tpu as pltpu

_LANE = 128  # every feature dimension is zero-padded to one full lane group


def _elu(y):
    # torch F.elu, alpha=1.0.  exp(min(y,0)) - 1 instead of expm1: guaranteed
    # Mosaic lowering; deviation from expm1 is <= ~1e-7 absolute.
    return jnp.where(y > 0, y, jnp.exp(jnp.minimum(y, 0.0)) - 1.0)


# ----------------------------------------------------------------------------
# Fused forward kernel
# ----------------------------------------------------------------------------
def _vae_fused_kernel(x_ref, eps_ref, w_ref, b_ref, h4_ref, y_ref, *,
                      emb_dim, d0):
    """Whole VAE_BN forward for one batch tile.

    x_ref  : (TB, 128) f32   input, lanes [0, D0), zeros elsewhere
    eps_ref: (TB, 128) f32   eps placed in lanes [E, 2E), zeros elsewhere
    w_ref  : (8, 128, 128) bf16  packed (Din, Dout) weights, zero-padded:
             [fc1, fc2, fc3, fc4,
              vstack([fc51|fc61, fc51|fc61])  (reparam fold),
              blockdiag(fc52, fc62), blockdiag(fc53, fc63),
              blockdiag(fc54, fc64)]
    b_ref  : (8, 1, 128) f32  packed biases (same order, zero-padded)
    h4_ref : (TB, 128) f32   out: [mu | logvar | 0...]
    y_ref  : (TB, 128) f32   out: [x_hat | softplus(fc64 out)]
    """

    def lin(h, i):
        return jnp.dot(h.astype(jnp.bfloat16), w_ref[i],
                       preferred_element_type=jnp.float32) + b_ref[i]

    # ---------------- encoder (dropout = identity in eval mode) -------------
    h = _elu(lin(x_ref[...], 0))
    h = _elu(lin(h, 1))
    h = _elu(lin(h, 2))
    h4 = lin(h, 3)                              # [mu | logvar | 0...]
    h4_ref[...] = h4

    # ---------- reparameterize, folded into the first decoder matmul --------
    # t = [mu | eps*exp(0.5*logvar) | 0] and w_ref[4] = [[W5]; [W5]], so
    # t @ w_ref[4] == (mu + eps*std) @ W5 == z @ [fc51 | fc61].
    lane = jax.lax.broadcasted_iota(jnp.int32, h4.shape, 1)
    t = jnp.where(lane < emb_dim, h4, eps_ref[...] * jnp.exp(0.5 * h4))

    # -------- decoder: both branches fused via block-diagonal weights -------
    h = _elu(lin(t, 4))
    h = _elu(lin(h, 5))
    h = _elu(lin(h, 6))
    y = lin(h, 7)                               # [fc54 out (d0) | fc64 out (d0)]
    y_ref[...] = jnp.where(lane < d0, y, jnp.logaddexp(y, 0.0))   # softplus half


# ----------------------------------------------------------------------------
# Parameters (deterministic synthetic init, torch-equivalent U(-1/sqrt(fan_in)))
# Weights stored PRE-TRANSPOSED as (Din, Dout); biases as (1, Dout).
# ----------------------------------------------------------------------------
def _linear_specs(layers, embedding_dim):
    return {
        "fc1":  (layers[0], layers[1]),
        "fc2":  (layers[1], layers[2]),
        "fc3":  (layers[2], layers[3]),
        "fc4":  (layers[3], 2 * embedding_dim),
        "fc51": (embedding_dim, layers[3]),
        "fc52": (layers[3], layers[2]),
        "fc53": (layers[2], layers[1]),
        "fc54": (layers[1], layers[0]),
        "fc61": (embedding_dim, layers[3]),
        "fc62": (layers[3], layers[2]),
        "fc63": (layers[2], layers[1]),
        "fc64": (layers[1], layers[0]),
    }


def init_vae_params(key, layers, embedding_dim):
    params = {}
    for name, (din, dout) in _linear_specs(layers, embedding_dim).items():
        key, kw, kb = jax.random.split(key, 3)
        bound = 1.0 / float(din) ** 0.5
        w = jax.random.uniform(kw, (din, dout), jnp.float32, -bound, bound)
        b = jax.random.uniform(kb, (1, dout), jnp.float32, -bound, bound)
        params[name] = (w, b)
    return params


# ----------------------------------------------------------------------------
# Weight packing: block-diag decoder fusion + one padded (8,128,128) buffer
# ----------------------------------------------------------------------------
def _block_diag(a, b):
    ra, ca = a.shape
    rb, cb = b.shape
    top = jnp.concatenate([a, jnp.zeros((ra, cb), a.dtype)], axis=1)
    bot = jnp.concatenate([jnp.zeros((rb, ca), b.dtype), b], axis=1)
    return jnp.concatenate([top, bot], axis=0)


def _pack_params(params, layers, emb_dim, weight_dtype=jnp.bfloat16):
    d0, d1, d2, d3 = layers
    assert max(2 * d0, 2 * d1, 2 * d2, 2 * d3, 2 * emb_dim) <= _LANE, (
        "fused kernel assumes every (doubled) feature dim fits in 128 lanes")

    w51, b51 = params["fc51"]
    w61, b61 = params["fc61"]
    w5 = jnp.concatenate([w51, w61], axis=1)        # (E, 2*D3)
    w5 = jnp.concatenate([w5, w5], axis=0)          # (2E, 2*D3) -- reparam fold
    b5 = jnp.concatenate([b51, b61], axis=1)

    mats = [
        params["fc1"], params["fc2"], params["fc3"], params["fc4"],
        (w5, b5),
        (_block_diag(params["fc52"][0], params["fc62"][0]),
         jnp.concatenate([params["fc52"][1], params["fc62"][1]], axis=1)),
        (_block_diag(params["fc53"][0], params["fc63"][0]),
         jnp.concatenate([params["fc53"][1], params["fc63"][1]], axis=1)),
        (_block_diag(params["fc54"][0], params["fc64"][0]),
         jnp.concatenate([params["fc54"][1], params["fc64"][1]], axis=1)),
    ]
    w_all = jnp.zeros((len(mats), _LANE, _LANE), jnp.float32)
    b_all = jnp.zeros((len(mats), 1, _LANE), jnp.float32)
    for i, (w, b) in enumerate(mats):
        w_all = w_all.at[i, :w.shape[0], :w.shape[1]].set(w)
        b_all = b_all.at[i, 0, :b.shape[1]].set(b[0])
    return w_all.astype(weight_dtype), b_all


# ----------------------------------------------------------------------------
# Forward wrapper: single pallas_call, lane-dense 128-wide I/O, weights packed
# ----------------------------------------------------------------------------
def _round_up(n, m):
    return ((n + m - 1) // m) * m


def _num_tensorcores():
    # v7x has 2 TensorCores per chip; v5e/v6e have 1 (heuristic, trace-time).
    try:
        kind = jax.devices()[0].device_kind.lower()
    except Exception:
        return 1
    return 2 if "7" in kind else 1


def vae_bn_forward(params, x, eps):
    B, d0 = x.shape
    emb = eps.shape[1]
    layers = [params["fc1"][0].shape[0], params["fc1"][0].shape[1],
              params["fc2"][0].shape[1], params["fc3"][0].shape[1]]
    assert layers[0] == d0 and params["fc51"][0].shape[0] == emb

    w_all, b_all = _pack_params(params, layers, emb)

    # Batch tile: whole batch in one grid step on single-core chips; >=2
    # "parallel" steps on v7x so both cores do work; cap to avoid f32 spills.
    tb_cap = 512
    n_cores = _num_tensorcores()
    b8 = _round_up(B, 8)
    steps = max(1, -(-b8 // tb_cap))
    if n_cores > 1 and b8 >= 8 * n_cores:
        steps = max(steps, n_cores)
    tb = _round_up(-(-b8 // steps), 8)
    b_pad = tb * steps

    # Zero-pad input to 128 lanes; place eps in lanes [E, 2E) for the fold.
    x_p = jnp.zeros((b_pad, _LANE), jnp.float32).at[:B, :d0].set(x)
    eps_p = jnp.zeros((b_pad, _LANE), jnp.float32).at[:B, emb:2 * emb].set(eps)

    batch_spec = pl.BlockSpec((tb, _LANE), lambda i: (i, 0))
    h4_out, y_out = pl.pallas_call(
        functools.partial(_vae_fused_kernel, emb_dim=emb, d0=d0),
        out_shape=(jax.ShapeDtypeStruct((b_pad, _LANE), jnp.float32),
                   jax.ShapeDtypeStruct((b_pad, _LANE), jnp.float32)),
        grid=(steps,),
        in_specs=[batch_spec, batch_spec,
                  pl.BlockSpec(w_all.shape, lambda i: (0, 0, 0)),
                  pl.BlockSpec(b_all.shape, lambda i: (0, 0, 0))],
        out_specs=(batch_spec, batch_spec),
        compiler_params=pltpu.CompilerParams(
            dimension_semantics=("parallel",)),
    )(x_p, eps_p, w_all, b_all)

    x_hat = y_out[:B, :d0]
    sigma_hat = y_out[:B, d0:2 * d0]
    mu = h4_out[:B, :emb]
    logvar = h4_out[:B, emb:2 * emb]
    return x_hat, sigma_hat, mu, logvar


# ----------------------------------------------------------------------------
# Pure-JAX f32 reference (original per-layer math, for correctness check)
# ----------------------------------------------------------------------------
def _ref_forward(params, x, eps, embedding_dim):
    def lin(h, name):
        w, b = params[name]
        return h @ w + b

    h = _elu(lin(x, "fc1"))
    h = _elu(lin(h, "fc2"))
    h = _elu(lin(h, "fc3"))
    h4 = lin(h, "fc4")
    mu, logvar = h4[:, :embedding_dim], h4[:, embedding_dim:2 * embedding_dim]
    z = mu + eps * jnp.exp(0.5 * logvar)

    o1 = _elu(lin(z, "fc51"))
    o1 = _elu(lin(o1, "fc52"))
    o1 = _elu(lin(o1, "fc53"))
    x_hat = lin(o1, "fc54")

    o2 = _elu(lin(z, "fc61"))
    o2 = _elu(lin(o2, "fc62"))
    o2 = _elu(lin(o2, "fc63"))
    sigma_hat = jax.nn.softplus(lin(o2, "fc64"))
    return x_hat, sigma_hat, mu, logvar


if __name__ == "__main__":
    # Small shapes consistent with the module: layers = [D0, D1, D2, D3]
    layers = [64, 48, 32, 24]
    embedding_dim = 16
    batch = 8

    key = jax.random.PRNGKey(0)
    k_params, k_x, k_eps = jax.random.split(key, 3)

    params = init_vae_params(k_params, layers, embedding_dim)
    x = jax.random.normal(k_x, (batch, layers[0]), jnp.float32)
    eps = jax.random.normal(k_eps, (batch, embedding_dim), jnp.float32)

    fwd = jax.jit(vae_bn_forward)
    outs = fwd(params, x, eps)
    jax.block_until_ready(outs)
    x_hat, sigma_hat, mu, logvar = outs

    # Shape / range sanity
    assert x_hat.shape == (batch, layers[0])
    assert sigma_hat.shape == (batch, layers[0])
    assert mu.shape == (batch, embedding_dim)
    assert logvar.shape == (batch, embedding_dim)
    assert bool(jnp.all(sigma_hat >= 0.0))       # softplus output non-negative

    # Numerical check against the f32 pure-JAX reference (kernel uses bf16
    # matmul operands with f32 accumulation, so allow a modest tolerance).
    refs = _ref_forward(params, x, eps, embedding_dim)
    for got, want in zip(outs, refs):
        err = float(jnp.max(jnp.abs(got - want)))
        assert jnp.allclose(got, want, rtol=2e-2, atol=2e-2), err

    print("KERNEL_OK")
</pallas_src>

<mosaic_0001>
module attributes {stable_mosaic.version = 11 : i64} {
  func.func @_vae_fused_kernel(%arg0: i32, %arg1: memref<8x128xf32, #tpu.memory_space<vmem>>, %arg2: memref<8x128xf32, #tpu.memory_space<vmem>>, %arg3: memref<8x128x128xbf16, #tpu.memory_space<vmem>>, %arg4: memref<8x1x128xf32, #tpu.memory_space<vmem>>, %arg5: memref<8x128xf32, #tpu.memory_space<vmem>>, %arg6: memref<8x128xf32, #tpu.memory_space<vmem>>) attributes {dimension_semantics = [#tpu.dimension_semantics<parallel>], iteration_bounds = array<i64: 1>, scalar_prefetch = 0 : i64, scratch_operands = 0 : i64, tpu.core_type = #tpu.core_type<tc>, window_params = [{transform_indices = @transform_0, window_bounds = array<i64: 8, 128>}, {transform_indices = @transform_1, window_bounds = array<i64: 8, 128>}, {pipeline_mode = #tpu.pipeline_mode<synchronous>, transform_indices = @transform_2, window_bounds = array<i64: 8, 128, 128>}, {pipeline_mode = #tpu.pipeline_mode<synchronous>, transform_indices = @transform_3, window_bounds = array<i64: 8, 1, 128>}, {transform_indices = @transform_4, window_bounds = array<i64: 8, 128>}, {transform_indices = @transform_5, window_bounds = array<i64: 8, 128>}]} {
    %c0 = arith.constant 0 : index
    %c0_0 = arith.constant 0 : index
    %0 = vector.load %arg1[%c0, %c0_0] : memref<8x128xf32, #tpu.memory_space<vmem>>, vector<8x128xf32>
    %1 = arith.truncf %0 : vector<8x128xf32> to vector<8x128xbf16>
    %c0_1 = arith.constant 0 : index
    %c0_2 = arith.constant 0 : index
    %c0_3 = arith.constant 0 : index
    %2 = vector.load %arg3[%c0_1, %c0_2, %c0_3] : memref<8x128x128xbf16, #tpu.memory_space<vmem>>, vector<1x128x128xbf16>
    %3 = vector.shape_cast %2 : vector<1x128x128xbf16> to vector<128x128xbf16>
    %cst = arith.constant dense<0.000000e+00> : vector<8x128xf32>
    %4 = tpu.matmul %1, %3, %cst {dimension_numbers = #tpu.dot_dimension_numbers<[1], [0], [0], [1], [0, 0, 1, 1], [], []>} : vector<8x128xbf16>, vector<128x128xbf16>, vector<8x128xf32> -> vector<8x128xf32>
    %c0_4 = arith.constant 0 : index
    %c0_5 = arith.constant 0 : index
    %c0_6 = arith.constant 0 : index
    %5 = vector.load %arg4[%c0_4, %c0_5, %c0_6] : memref<8x1x128xf32, #tpu.memory_space<vmem>>, vector<1x1x128xf32>
    %6 = vector.shape_cast %5 : vector<1x1x128xf32> to vector<1x128xf32>
    %7 = vector.broadcast %6 : vector<1x128xf32> to vector<8x128xf32>
    %8 = arith.addf %4, %7 : vector<8x128xf32>
    %cst_7 = arith.constant 0.000000e+00 : f32
    %9 = vector.broadcast %cst_7 : f32 to vector<8x128xf32>
    %10 = arith.cmpf ogt, %8, %9 : vector<8x128xf32>
    %cst_8 = arith.constant 0.000000e+00 : f32
    %11 = vector.broadcast %cst_8 : f32 to vector<8x128xf32>
    %12 = arith.minimumf %8, %11 : vector<8x128xf32>
    %13 = math.exp %12 : vector<8x128xf32>
    %cst_9 = arith.constant 1.000000e+00 : f32
    %14 = vector.broadcast %cst_9 : f32 to vector<8x128xf32>
    %15 = arith.subf %13, %14 : vector<8x128xf32>
    %16 = arith.select %10, %8, %15 : vector<8x128xi1>, vector<8x128xf32>
    %17 = arith.truncf %16 : vector<8x128xf32> to vector<8x128xbf16>
    %c1 = arith.constant 1 : index
    %c0_10 = arith.constant 0 : index
    %c0_11 = arith.constant 0 : index
    %18 = vector.load %arg3[%c1, %c0_10, %c0_11] : memref<8x128x128xbf16, #tpu.memory_space<vmem>>, vector<1x128x128xbf16>
    %19 = vector.shape_cast %18 : vector<1x128x128xbf16> to vector<128x128xbf16>
    %cst_12 = arith.constant dense<0.000000e+00> : vector<8x128xf32>
    %20 = tpu.matmul %17, %19, %cst_12 {dimension_numbers = #tpu.dot_dimension_numbers<[1], [0], [0], [1], [0, 0, 1, 1], [], []>} : vector<8x128xbf16>, vector<128x128xbf16>, vector<8x128xf32> -> vector<8x128xf32>
    %c1_13 = arith.constant 1 : index
    %c0_14 = arith.constant 0 : index
    %c0_15 = arith.constant 0 : index
    %21 = vector.load %arg4[%c1_13, %c0_14, %c0_15] : memref<8x1x128xf32, #tpu.memory_space<vmem>>, vector<1x1x128xf32>
    %22 = vector.shape_cast %21 : vector<1x1x128xf32> to vector<1x128xf32>
    %23 = vector.broadcast %22 : vector<1x128xf32> to vector<8x128xf32>
    %24 = arith.addf %20, %23 : vector<8x128xf32>
    %cst_16 = arith.constant 0.000000e+00 : f32
    %25 = vector.broadcast %cst_16 : f32 to vector<8x128xf32>
    %26 = arith.cmpf ogt, %24, %25 : vector<8x128xf32>
    %cst_17 = arith.constant 0.000000e+00 : f32
    %27 = vector.broadcast %cst_17 : f32 to vector<8x128xf32>
    %28 = arith.minimumf %24, %27 : vector<8x128xf32>
    %29 = math.exp %28 : vector<8x128xf32>
    %cst_18 = arith.constant 1.000000e+00 : f32
    %30 = vector.broadcast %cst_18 : f32 to vector<8x128xf32>
    %31 = arith.subf %29, %30 : vector<8x128xf32>
    %32 = arith.select %26, %24, %31 : vector<8x128xi1>, vector<8x128xf32>
    %33 = arith.truncf %32 : vector<8x128xf32> to vector<8x128xbf16>
    %c2 = arith.constant 2 : index
    %c0_19 = arith.constant 0 : index
    %c0_20 = arith.constant 0 : index
    %34 = vector.load %arg3[%c2, %c0_19, %c0_20] : memref<8x128x128xbf16, #tpu.memory_space<vmem>>, vector<1x128x128xbf16>
    %35 = vector.shape_cast %34 : vector<1x128x128xbf16> to vector<128x128xbf16>
    %cst_21 = arith.constant dense<0.000000e+00> : vector<8x128xf32>
    %36 = tpu.matmul %33, %35, %cst_21 {dimension_numbers = #tpu.dot_dimension_numbers<[1], [0], [0], [1], [0, 0, 1, 1], [], []>} : vector<8x128xbf16>, vector<128x128xbf16>, vector<8x128xf32> -> vector<8x128xf32>
    %c2_22 = arith.constant 2 : index
    %c0_23 = arith.constant 0 : index
    %c0_24 = arith.constant 0 : index
    %37 = vector.load %arg4[%c2_22, %c0_23, %c0_24] : memref<8x1x128xf32, #tpu.memory_space<vmem>>, vector<1x1x128xf32>
    %38 = vector.shape_cast %37 : vector<1x1x128xf32> to vector<1x128xf32>
    %39 = vector.broadcast %38 : vector<1x128xf32> to vector<8x128xf32>
    %40 = arith.addf %36, %39 : vector<8x128xf32>
    %cst_25 = arith.constant 0.000000e+00 : f32
    %41 = vector.broadcast %cst_25 : f32 to vector<8x128xf32>
    %42 = arith.cmpf ogt, %40, %41 : vector<8x128xf32>
    %cst_26 = arith.constant 0.000000e+00 : f32
    %43 = vector.broadcast %cst_26 : f32 to vector<8x128xf32>
    %44 = arith.minimumf %40, %43 : vector<8x128xf32>
    %45 = math.exp %44 : vector<8x128xf32>
    %cst_27 = arith.constant 1.000000e+00 : f32
    %46 = vector.broadcast %cst_27 : f32 to vector<8x128xf32>
    %47 = arith.subf %45, %46 : vector<8x128xf32>
    %48 = arith.select %42, %40, %47 : vector<8x128xi1>, vector<8x128xf32>
    %49 = arith.truncf %48 : vector<8x128xf32> to vector<8x128xbf16>
    %c3 = arith.constant 3 : index
    %c0_28 = arith.constant 0 : index
    %c0_29 = arith.constant 0 : index
    %50 = vector.load %arg3[%c3, %c0_28, %c0_29] : memref<8x128x128xbf16, #tpu.memory_space<vmem>>, vector<1x128x128xbf16>
    %51 = vector.shape_cast %50 : vector<1x128x128xbf16> to vector<128x128xbf16>
    %cst_30 = arith.constant dense<0.000000e+00> : vector<8x128xf32>
    %52 = tpu.matmul %49, %51, %cst_30 {dimension_numbers = #tpu.dot_dimension_numbers<[1], [0], [0], [1], [0, 0, 1, 1], [], []>} : vector<8x128xbf16>, vector<128x128xbf16>, vector<8x128xf32> -> vector<8x128xf32>
    %c3_31 = arith.constant 3 : index
    %c0_32 = arith.constant 0 : index
    %c0_33 = arith.constant 0 : index
    %53 = vector.load %arg4[%c3_31, %c0_32, %c0_33] : memref<8x1x128xf32, #tpu.memory_space<vmem>>, vector<1x1x128xf32>
    %54 = vector.shape_cast %53 : vector<1x1x128xf32> to vector<1x128xf32>
    %55 = vector.broadcast %54 : vector<1x128xf32> to vector<8x128xf32>
    %56 = arith.addf %52, %55 : vector<8x128xf32>
    %c0_34 = arith.constant 0 : index
    %c0_35 = arith.constant 0 : index
    %57 = vector.load %arg5[%c0_34, %c0_35] : memref<8x128xf32, #tpu.memory_space<vmem>>, vector<8x128xf32>
    tpu.vector_store %arg5[%c0_34, %c0_35], %56 {strides = array<i32>} : memref<8x128xf32, #tpu.memory_space<vmem>>, vector<8x128xf32>,
    %58 = tpu.iota {dimensions = array<i32: 1>} : vector<8x128xi32>
    %c16_i32 = arith.constant 16 : i32
    %59 = vector.broadcast %c16_i32 : i32 to vector<8x128xi32>
    %60 = arith.cmpi slt, %58, %59 : vector<8x128xi32>
    %c0_36 = arith.constant 0 : index
    %c0_37 = arith.constant 0 : index
    %61 = vector.load %arg2[%c0_36, %c0_37] : memref<8x128xf32, #tpu.memory_space<vmem>>, vector<8x128xf32>
    %cst_38 = arith.constant 5.000000e-01 : f32
    %62 = vector.broadcast %cst_38 : f32 to vector<8x128xf32>
    %63 = arith.mulf %62, %56 : vector<8x128xf32>
    %64 = math.exp %63 : vector<8x128xf32>
    %65 = arith.mulf %61, %64 : vector<8x128xf32>
    %66 = arith.select %60, %56, %65 : vector<8x128xi1>, vector<8x128xf32>
    %67 = arith.truncf %66 : vector<8x128xf32> to vector<8x128xbf16>
    %c4 = arith.constant 4 : index
    %c0_39 = arith.constant 0 : index
    %c0_40 = arith.constant 0 : index
    %68 = vector.load %arg3[%c4, %c0_39, %c0_40] : memref<8x128x128xbf16, #tpu.memory_space<vmem>>, vector<1x128x128xbf16>
    %69 = vector.shape_cast %68 : vector<1x128x128xbf16> to vector<128x128xbf16>
    %cst_41 = arith.constant dense<0.000000e+00> : vector<8x128xf32>
    %70 = tpu.matmul %67, %69, %cst_41 {dimension_numbers = #tpu.dot_dimension_numbers<[1], [0], [0], [1], [0, 0, 1, 1], [], []>} : vector<8x128xbf16>, vector<128x128xbf16>, vector<8x128xf32> -> vector<8x128xf32>
    %c4_42 = arith.constant 4 : index
    %c0_43 = arith.constant 0 : index
    %c0_44 = arith.constant 0 : index
    %71 = vector.load %arg4[%c4_42, %c0_43, %c0_44] : memref<8x1x128xf32, #tpu.memory_space<vmem>>, vector<1x1x128xf32>
    %72 = vector.shape_cast %71 : vector<1x1x128xf32> to vector<1x128xf32>
    %73 = vector.broadcast %72 : vector<1x128xf32> to vector<8x128xf32>
    %74 = arith.addf %70, %73 : vector<8x128xf32>
    %cst_45 = arith.constant 0.000000e+00 : f32
    %75 = vector.broadcast %cst_45 : f32 to vector<8x128xf32>
    %76 = arith.cmpf ogt, %74, %75 : vector<8x128xf32>
    %cst_46 = arith.constant 0.000000e+00 : f32
    %77 = vector.broadcast %cst_46 : f32 to vector<8x128xf32>
    %78 = arith.minimumf %74, %77 : vector<8x128xf32>
    %79 = math.exp %78 : vector<8x128xf32>
    %cst_47 = arith.constant 1.000000e+00 : f32
    %80 = vector.broadcast %cst_47 : f32 to vector<8x128xf32>
    %81 = arith.subf %79, %80 : vector<8x128xf32>
    %82 = arith.select %76, %74, %81 : vector<8x128xi1>, vector<8x128xf32>
    %83 = arith.truncf %82 : vector<8x128xf32> to vector<8x128xbf16>
    %c5 = arith.constant 5 : index
    %c0_48 = arith.constant 0 : index
    %c0_49 = arith.constant 0 : index
    %84 = vector.load %arg3[%c5, %c0_48, %c0_49] : memref<8x128x128xbf16, #tpu.memory_space<vmem>>, vector<1x128x128xbf16>
    %85 = vector.shape_cast %84 : vector<1x128x128xbf16> to vector<128x128xbf16>
    %cst_50 = arith.constant dense<0.000000e+00> : vector<8x128xf32>
    %86 = tpu.matmul %83, %85, %cst_50 {dimension_numbers = #tpu.dot_dimension_numbers<[1], [0], [0], [1], [0, 0, 1, 1], [], []>} : vector<8x128xbf16>, vector<128x128xbf16>, vector<8x128xf32> -> vector<8x128xf32>
    %c5_51 = arith.constant 5 : index
    %c0_52 = arith.constant 0 : index
    %c0_53 = arith.constant 0 : index
    %87 = vector.load %arg4[%c5_51, %c0_52, %c0_53] : memref<8x1x128xf32, #tpu.memory_space<vmem>>, vector<1x1x128xf32>
    %88 = vector.shape_cast %87 : vector<1x1x128xf32> to vector<1x128xf32>
    %89 = vector.broadcast %88 : vector<1x128xf32> to vector<8x128xf32>
    %90 = arith.addf %86, %89 : vector<8x128xf32>
    %cst_54 = arith.constant 0.000000e+00 : f32
    %91 = vector.broadcast %cst_54 : f32 to vector<8x128xf32>
    %92 = arith.cmpf ogt, %90, %91 : vector<8x128xf32>
    %cst_55 = arith.constant 0.000000e+00 : f32
    %93 = vector.broadcast %cst_55 : f32 to vector<8x128xf32>
    %94 = arith.minimumf %90, %93 : vector<8x128xf32>
    %95 = math.exp %94 : vector<8x128xf32>
    %cst_56 = arith.constant 1.000000e+00 : f32
    %96 = vector.broadcast %cst_56 : f32 to vector<8x128xf32>
    %97 = arith.subf %95, %96 : vector<8x128xf32>
    %98 = arith.select %92, %90, %97 : vector<8x128xi1>, vector<8x128xf32>
    %99 = arith.truncf %98 : vector<8x128xf32> to vector<8x128xbf16>
    %c6 = arith.constant 6 : index
    %c0_57 = arith.constant 0 : index
    %c0_58 = arith.constant 0 : index
    %100 = vector.load %arg3[%c6, %c0_57, %c0_58] : memref<8x128x128xbf16, #tpu.memory_space<vmem>>, vector<1x128x128xbf16>
    %101 = vector.shape_cast %100 : vector<1x128x128xbf16> to vector<128x128xbf16>
    %cst_59 = arith.constant dense<0.000000e+00> : vector<8x128xf32>
    %102 = tpu.matmul %99, %101, %cst_59 {dimension_numbers = #tpu.dot_dimension_numbers<[1], [0], [0], [1], [0, 0, 1, 1], [], []>} : vector<8x128xbf16>, vector<128x128xbf16>, vector<8x128xf32> -> vector<8x128xf32>
    %c6_60 = arith.constant 6 : index
    %c0_61 = arith.constant 0 : index
    %c0_62 = arith.constant 0 : index
    %103 = vector.load %arg4[%c6_60, %c0_61, %c0_62] : memref<8x1x128xf32, #tpu.memory_space<vmem>>, vector<1x1x128xf32>
    %104 = vector.shape_cast %103 : vector<1x1x128xf32> to vector<1x128xf32>
    %105 = vector.broadcast %104 : vector<1x128xf32> to vector<8x128xf32>
    %106 = arith.addf %102, %105 : vector<8x128xf32>
    %cst_63 = arith.constant 0.000000e+00 : f32
    %107 = vector.broadcast %cst_63 : f32 to vector<8x128xf32>
    %108 = arith.cmpf ogt, %106, %107 : vector<8x128xf32>
    %cst_64 = arith.constant 0.000000e+00 : f32
    %109 = vector.broadcast %cst_64 : f32 to vector<8x128xf32>
    %110 = arith.minimumf %106, %109 : vector<8x128xf32>
    %111 = math.exp %110 : vector<8x128xf32>
    %cst_65 = arith.constant 1.000000e+00 : f32
    %112 = vector.broadcast %cst_65 : f32 to vector<8x128xf32>
    %113 = arith.subf %111, %112 : vector<8x128xf32>
    %114 = arith.select %108, %106, %113 : vector<8x128xi1>, vector<8x128xf32>
    %115 = arith.truncf %114 : vector<8x128xf32> to vector<8x128xbf16>
    %c7 = arith.constant 7 : index
    %c0_66 = arith.constant 0 : index
    %c0_67 = arith.constant 0 : index
    %116 = vector.load %arg3[%c7, %c0_66, %c0_67] : memref<8x128x128xbf16, #tpu.memory_space<vmem>>, vector<1x128x128xbf16>
    %117 = vector.shape_cast %116 : vector<1x128x128xbf16> to vector<128x128xbf16>
    %cst_68 = arith.constant dense<0.000000e+00> : vector<8x128xf32>
    %118 = tpu.matmul %115, %117, %cst_68 {dimension_numbers = #tpu.dot_dimension_numbers<[1], [0], [0], [1], [0, 0, 1, 1], [], []>} : vector<8x128xbf16>, vector<128x128xbf16>, vector<8x128xf32> -> vector<8x128xf32>
    %c7_69 = arith.constant 7 : index
    %c0_70 = arith.constant 0 : index
    %c0_71 = arith.constant 0 : index
    %119 = vector.load %arg4[%c7_69, %c0_70, %c0_71] : memref<8x1x128xf32, #tpu.memory_space<vmem>>, vector<1x1x128xf32>
    %120 = vector.shape_cast %119 : vector<1x1x128xf32> to vector<1x128xf32>
    %121 = vector.broadcast %120 : vector<1x128xf32> to vector<8x128xf32>
    %122 = arith.addf %118, %121 : vector<8x128xf32>
    %c64_i32 = arith.constant 64 : i32
    %123 = vector.broadcast %c64_i32 : i32 to vector<8x128xi32>
    %124 = arith.cmpi slt, %58, %123 : vector<8x128xi32>
    %cst_72 = arith.constant 0.000000e+00 : f32
    %125 = vector.broadcast %cst_72 : f32 to vector<8x128xf32>
    %126 = arith.maximumf %122, %125 : vector<8x128xf32>
    %127 = vector.broadcast %cst_72 : f32 to vector<8x128xf32>
    %128 = arith.subf %122, %127 : vector<8x128xf32>
    %129 = arith.cmpf one, %128, %128 : vector<8x128xf32>
    %130 = vector.broadcast %cst_72 : f32 to vector<8x128xf32>
    %131 = arith.addf %122, %130 : vector<8x128xf32>
    %132 = math.absf %128 : vector<8x128xf32>
    %cst_73 = arith.constant 0.000000e+00 : f32
    %133 = vector.broadcast %cst_73 : f32 to vector<8x128xf32>
    %134 = arith.subf %133, %132 : vector<8x128xf32>
    %135 = math.exp %134 : vector<8x128xf32>
    %136 = math.log1p %135 : vector<8x128xf32>
    %137 = arith.addf %126, %136 : vector<8x128xf32>
    %138 = arith.select %129, %131, %137 : vector<8x128xi1>, vector<8x128xf32>
    %139 = arith.select %124, %122, %138 : vector<8x128xi1>, vector<8x128xf32>
    %c0_74 = arith.constant 0 : index
    %c0_75 = arith.constant 0 : index
    %140 = vector.load %arg6[%c0_74, %c0_75] : memref<8x128xf32, #tpu.memory_space<vmem>>, vector<8x128xf32>
    tpu.vector_store %arg6[%c0_74, %c0_75], %139 {strides = array<i32>} : memref<8x128xf32, #tpu.memory_space<vmem>>, vector<8x128xf32>,
    return
  }
  func.func @transform_0(%arg0: i32) -> (i32, i32) {
    %c0_i32 = arith.constant 0 : i32
    %c0_i32_0 = arith.constant 0 : i32
    return %arg0, %c0_i32 : i32, i32
  }
  func.func @transform_1(%arg0: i32) -> (i32, i32) {
    %c0_i32 = arith.constant 0 : i32
    %c0_i32_0 = arith.constant 0 : i32
    return %arg0, %c0_i32 : i32, i32
  }
  func.func @transform_2(%arg0: i32) -> (i32, i32, i32) {
    %c0_i32 = arith.constant 0 : i32
    %c0_i32_0 = arith.constant 0 : i32
    %c0_i32_1 = arith.constant 0 : i32
    %c0_i32_2 = arith.constant 0 : i32
    return %c0_i32, %c0_i32_0, %c0_i32_1 : i32, i32, i32
  }
  func.func @transform_3(%arg0: i32) -> (i32, i32, i32) {
    %c0_i32 = arith.constant 0 : i32
    %c0_i32_0 = arith.constant 0 : i32
    %c0_i32_1 = arith.constant 0 : i32
    %c0_i32_2 = arith.constant 0 : i32
    return %c0_i32, %c0_i32_0, %c0_i32_1 : i32, i32, i32
  }
  func.func @transform_4(%arg0: i32) -> (i32, i32) {
    %c0_i32 = arith.constant 0 : i32
    %c0_i32_0 = arith.constant 0 : i32
    return %arg0, %c0_i32 : i32, i32
  }
  func.func @transform_5(%arg0: i32) -> (i32, i32) {
    %c0_i32 = arith.constant 0 : i32
    %c0_i32_0 = arith.constant 0 : i32
    return %arg0, %c0_i32 : i32, i32
  }
}

</mosaic_0001>

<llo_original>
// kernel: vae_bn_forward.1
$region0: #{vae_bn_forward.1}
  #allocation0 [shape = 'u32[]', space=smem, size = 0x4, offset = 0x4, fixed_abs, tag = 'smem constant byte address 0x4 - core index']
  #allocation1 [shape = 'u32[144,128]{1,0:T(1,128)}', space=vmem, size = 0x12000, scoped, tag = 'internal scratch']
  %s0 = inlined_call_operand.vmem [shape: f32[8,128], index: 0, kind: input, shape index: {}]
  %s1 = inlined_call_operand.vmem [shape: f32[8,128], index: 1, kind: input, shape index: {}]
  %s2 = inlined_call_operand.vmem [shape: bf16[8,128,128], index: 2, kind: input, shape index: {}]
  %s3 = inlined_call_operand.vmem [shape: f32[8,1,128], index: 3, kind: input, shape index: {}]
  %s4 = inlined_call_operand.vmem [shape: f32[8,128], index: 4, kind: output, shape index: {0}]
  %s5 = inlined_call_operand.vmem [shape: f32[8,128], index: 5, kind: output, shape index: {1}]
  %6 = xla_tuple %s4, %s5
  %s7 = sld [smem:[#allocation0]]
  $region34: #{vae_bn_forward.1} parent=0
    _
  %s9 = ssub.s32 1, %s7
  %s10 = scalar_select 0, %s9, %s7
  // Predicated region
  $region2: #{vae_bn_forward.1} parent=0 // pred_check
    _
  $region3: #{vae_bn_forward.1} parent=0 // pred_check_branch
    %12 = sbr.rel (0) target = $region5
  $region4: #{vae_bn_forward.1} parent=0 // pred_region
    _
  $region5: #{vae_bn_forward.1} parent=0 // pred_fallthru
    _
  // Predicated region
  $region6: #{vae_bn_forward.1} parent=0 // pred_check
    _
  $region7: #{vae_bn_forward.1} parent=0 // pred_check_branch
    %14 = sbr.rel (0) target = $region9
  $region8: #{vae_bn_forward.1} parent=0 // pred_region
    _
  $region9: #{vae_bn_forward.1} parent=0 // pred_fallthru
    _
  // Predicated region
  $region10: #{vae_bn_forward.1} parent=0 // pred_check
    _
  $region11: #{vae_bn_forward.1} parent=0 // pred_check_branch
    %16 = sbr.rel (0) target = $region13
  $region12: #{vae_bn_forward.1} parent=0 // pred_region
    _
  $region13: #{vae_bn_forward.1} parent=0 // pred_fallthru
    _
  // Predicated region
  $region14: #{vae_bn_forward.1} parent=0 // pred_check
    _
  $region15: #{vae_bn_forward.1} parent=0 // pred_check_branch
    %18 = sbr.rel (0) target = $region17
  $region16: #{vae_bn_forward.1} parent=0 // pred_region
    _
  $region17: #{vae_bn_forward.1} parent=0 // pred_fallthru
    _
  %v20 = vld [vmem:[%s0] sm:$0xff]
  %v21 = vpack.c.bf16 %v20, %v20
  %v22 = vld [vmem:[%s2] sm:$0xf]
  %v23 = vld [vmem:[%s2 + $0x4] sm:$0xf]
  %v24 = vld [vmem:[%s2 + $0x8] sm:$0xf]
  %v25 = vld [vmem:[%s2 + $0xc] sm:$0xf]
  %v26 = vld [vmem:[%s2 + $0x10] sm:$0xf]
  %v27 = vld [vmem:[%s2 + $0x14] sm:$0xf]
  %v28 = vld [vmem:[%s2 + $0x18] sm:$0xf]
  %v29 = vld [vmem:[%s2 + $0x1c] sm:$0xf]
  %v30 = vld [vmem:[%s2 + $0x20] sm:$0xf]
  %v31 = vld [vmem:[%s2 + $0x24] sm:$0xf]
  %v32 = vld [vmem:[%s2 + $0x28] sm:$0xf]
  %v33 = vld [vmem:[%s2 + $0x2c] sm:$0xf]
  %v34 = vld [vmem:[%s2 + $0x30] sm:$0xf]
  %v35 = vld [vmem:[%s2 + $0x34] sm:$0xf]
  %v36 = vld [vmem:[%s2 + $0x38] sm:$0xf]
  %v37 = vld [vmem:[%s2 + $0x3c] sm:$0xf]
  %v38 = vld [vmem:[%s3] sm:$0x1]
  %v40 = vlaneseq
  %v41 = vshrl.u32 %v40, 7
  %v42 = vsub.s32 0, %v41
  %v43 = vrot.slane %v38, %v42
  %v61 = vunpack.c.l.b16 %v22
  %v62 = vunpack.c.l.b16 %v23
  %v63 = vunpack.c.l.b16 %v24
  %v64 = vunpack.c.l.b16 %v25
  %v65 = vunpack.c.l.b16 %v26
  %v66 = vunpack.c.l.b16 %v27
  %v67 = vunpack.c.l.b16 %v28
  %v68 = vunpack.c.l.b16 %v29
  %v69 = vunpack.c.l.b16 %v30
  %v70 = vunpack.c.l.b16 %v31
  %v71 = vunpack.c.l.b16 %v32
  %v72 = vunpack.c.l.b16 %v33
  %v73 = vunpack.c.l.b16 %v34
  %v74 = vunpack.c.l.b16 %v35
  %v75 = vunpack.c.l.b16 %v36
  %v76 = vunpack.c.l.b16 %v37
  %v77 = vpack.c.b16 %v62, %v61
  %v78 = vpack.c.b16 %v64, %v63
  %v79 = vpack.c.b16 %v66, %v65
  %v80 = vpack.c.b16 %v68, %v67
  %v81 = vpack.c.b16 %v70, %v69
  %v82 = vpack.c.b16 %v72, %v71
  %v83 = vpack.c.b16 %v74, %v73
  %v84 = vpack.c.b16 %v76, %v75
  %93 = vmatprep.subr.bf16.mxu0 0
  %94 = vmatpush1.bf16.msra.mxu0 %v84
  %95 = vmatprep.subr.bf16.mxu0 0
  %96 = vmatpush1.bf16.msra.mxu0 %v83
  %97 = vmatprep.subr.bf16.mxu0 0
  %98 = vmatpush1.bf16.msra.mxu0 %v82
  %99 = vmatprep.subr.bf16.mxu0 0
  %100 = vmatpush1.bf16.msra.mxu0 %v81
  %101 = vmatprep.subr.bf16.mxu0 0
  %102 = vmatpush1.bf16.msra.mxu0 %v80
  %103 = vmatprep.subr.bf16.mxu0 0
  %104 = vmatpush1.bf16.msra.mxu0 %v79
  %105 = vmatprep.subr.bf16.mxu0 0
  %106 = vmatpush1.bf16.msra.mxu0 %v78
  %107 = vmatprep.subr.bf16.mxu0 0
  %108 = vmatpush1.bf16.msra.mxu0 %v77
  %109 = vmatprep.subr.bf16.mxu0 0
  %110 = vmatpush2.bf16.msra.mxu0 0
  %111 = vmatprep.subr.bf16.mxu0 0
  %112 = vmatpush2.bf16.msra.mxu0 0
  %113 = vmatprep.subr.bf16.mxu0 0
  %114 = vmatpush2.bf16.msra.mxu0 0
  %115 = vmatprep.subr.bf16.mxu0 0
  %116 = vmatpush2.bf16.msra.mxu0 0
  %117 = vmatprep.subr.bf16.mxu0 0
  %118 = vmatpush2.bf16.msra.mxu0 0
  %119 = vmatprep.subr.bf16.mxu0 0
  %120 = vmatpush2.bf16.msra.mxu0 0
  %121 = vmatprep.subr.bf16.mxu0 0
  %122 = vmatpush2.bf16.msra.mxu0 0
  %123 = vmatprep.subr.bf16.mxu0 0
  %124 = vmatpush2.bf16.msra.mxu0 0
  %125 = vmatprep.mubr.bf16.mxu0 0
  %126 = vmatmul.mubr.bf16.gmra.mxu0 %v21
  %v127 = vpop.f32.mrf.mxu0
  %v128 = vadd.f32 %v43, %v127
  %v129 = vpop.f32.mrf.mxu0
  %v130 = vpop.f32.mrf.mxu0
  %v131 = vpop.f32.mrf.mxu0
  %132 = vdwg.mxu0
  %vm133 = vcmp.gt.f32.partialorder %v128, 0.0
  %v134 = vmin.f32 %v128, 0.0
  %v135 = vmul.f32 %v134, 1.442695
  %v136 = vpow.pop %v135
  %v137 = vsub.f32 %v136, 1.0
  %v138 = vsel %vm133, %v128, %v137
  %v139 = vpack.c.bf16 %v138, %v138
  %s140 = scalar_lea.vmem %s2, 64
  %v141 = vld [vmem:[%s140] sm:$0xf]
  %v142 = vld [vmem:[%s140 + $0x4] sm:$0xf]
  %v143 = vld [vmem:[%s140 + $0x8] sm:$0xf]
  %v144 = vld [vmem:[%s140 + $0xc] sm:$0xf]
  %v145 = vld [vmem:[%s140 + $0x10] sm:$0xf]
  %v146 = vld [vmem:[%s140 + $0x14] sm:$0xf]
  %v147 = vld [vmem:[%s140 + $0x18] sm:$0xf]
  %v148 = vld [vmem:[%s140 + $0x1c] sm:$0xf]
  %v149 = vld [vmem:[%s140 + $0x20] sm:$0xf]
  %v150 = vld [vmem:[%s140 + $0x24] sm:$0xf]
  %v151 = vld [vmem:[%s140 + $0x28] sm:$0xf]
  %v152 = vld [vmem:[%s140 + $0x2c] sm:$0xf]
  %v153 = vld [vmem:[%s140 + $0x30] sm:$0xf]
  %v154 = vld [vmem:[%s140 + $0x34] sm:$0xf]
  %v155 = vld [vmem:[%s140 + $0x38] sm:$0xf]
  %v156 = vld [vmem:[%s140 + $0x3c] sm:$0xf]
  %s157 = scalar_lea.vmem %s3, 1
  %v158 = vld [vmem:[%s157] sm:$0x1]
  %v160 = vlaneseq
  %v161 = vshrl.u32 %v160, 7
  %v162 = vsub.s32 0, %v161
  %v163 = vrot.slane %v158, %v162
  %v181 = vunpack.c.l.b16 %v141
  %v182 = vunpack.c.l.b16 %v142
  %v183 = vunpack.c.l.b16 %v143
  %v184 = vunpack.c.l.b16 %v144
  %v185 = vunpack.c.l.b16 %v145
  %v186 = vunpack.c.l.b16 %v146
  %v187 = vunpack.c.l.b16 %v147
  %v188 = vunpack.c.l.b16 %v148
  %v189 = vunpack.c.l.b16 %v149
  %v190 = vunpack.c.l.b16 %v150
  %v191 = vunpack.c.l.b16 %v151
  %v192 = vunpack.c.l.b16 %v152
  %v193 = vunpack.c.l.b16 %v153
  %v194 = vunpack.c.l.b16 %v154
  %v195 = vunpack.c.l.b16 %v155
  %v196 = vunpack.c.l.b16 %v156
  %v197 = vpack.c.b16 %v182, %v181
  %v198 = vpack.c.b16 %v184, %v183
  %v199 = vpack.c.b16 %v186, %v185
  %v200 = vpack.c.b16 %v188, %v187
  %v201 = vpack.c.b16 %v190, %v189
  %v202 = vpack.c.b16 %v192, %v191
  %v203 = vpack.c.b16 %v194, %v193
  %v204 = vpack.c.b16 %v196, %v195
  %213 = vmatprep.subr.bf16.mxu0 0
  %214 = vmatpush1.bf16.msra.mxu0 %v204
  %215 = vmatprep.subr.bf16.mxu0 0
  %216 = vmatpush1.bf16.msra.mxu0 %v203
  %217 = vmatprep.subr.bf16.mxu0 0
  %218 = vmatpush1.bf16.msra.mxu0 %v202
  %219 = vmatprep.subr.bf16.mxu0 0
  %220 = vmatpush1.bf16.msra.mxu0 %v201
  %221 = vmatprep.subr.bf16.mxu0 0
  %222 = vmatpush1.bf16.msra.mxu0 %v200
  %223 = vmatprep.subr.bf16.mxu0 0
  %224 = vmatpush1.bf16.msra.mxu0 %v199
  %225 = vmatprep.subr.bf16.mxu0 0
  %226 = vmatpush1.bf16.msra.mxu0 %v198
  %227 = vmatprep.subr.bf16.mxu0 0
  %228 = vmatpush1.bf16.msra.mxu0 %v197
  %229 = vmatprep.subr.bf16.mxu0 0
  %230 = vmatpush2.bf16.msra.mxu0 0
  %231 = vmatprep.subr.bf16.mxu0 0
  %232 = vmatpush2.bf16.msra.mxu0 0
  %233 = vmatprep.subr.bf16.mxu0 0
  %234 = vmatpush2.bf16.msra.mxu0 0
  %235 = vmatprep.subr.bf16.mxu0 0
  %236 = vmatpush2.bf16.msra.mxu0 0
  %237 = vmatprep.subr.bf16.mxu0 0
  %238 = vmatpush2.bf16.msra.mxu0 0
  %239 = vmatprep.subr.bf16.mxu0 0
  %240 = vmatpush2.bf16.msra.mxu0 0
  %241 = vmatprep.subr.bf16.mxu0 0
  %242 = vmatpush2.bf16.msra.mxu0 0
  %243 = vmatprep.subr.bf16.mxu0 0
  %244 = vmatpush2.bf16.msra.mxu0 0
  %245 = vmatprep.mubr.bf16.mxu0 0
  %246 = vmatmul.mubr.bf16.gmra.mxu0 %v139
  %v247 = vpop.f32.mrf.mxu0
  %v248 = vadd.f32 %v163, %v247
  %v249 = vpop.f32.mrf.mxu0
  %v250 = vpop.f32.mrf.mxu0
  %v251 = vpop.f32.mrf.mxu0
  %252 = vdwg.mxu0
  %vm253 = vcmp.gt.f32.partialorder %v248, 0.0
  %v254 = vmin.f32 %v248, 0.0
  %v255 = vmul.f32 %v254, 1.442695
  %v256 = vpow.pop %v255
  %v257 = vsub.f32 %v256, 1.0
  %v258 = vsel %vm253, %v248, %v257
  %v259 = vpack.c.bf16 %v258, %v258
  %s260 = scalar_lea.vmem %s2, 128
  %v261 = vld [vmem:[%s260] sm:$0xf]
  %v262 = vld [vmem:[%s260 + $0x4] sm:$0xf]
  %v263 = vld [vmem:[%s260 + $0x8] sm:$0xf]
  %v264 = vld [vmem:[%s260 + $0xc] sm:$0xf]
  %v265 = vld [vmem:[%s260 + $0x10] sm:$0xf]
  %v266 = vld [vmem:[%s260 + $0x14] sm:$0xf]
  %v267 = vld [vmem:[%s260 + $0x18] sm:$0xf]
  %v268 = vld [vmem:[%s260 + $0x1c] sm:$0xf]
  %v269 = vld [vmem:[%s260 + $0x20] sm:$0xf]
  %v270 = vld [vmem:[%s260 + $0x24] sm:$0xf]
  %v271 = vld [vmem:[%s260 + $0x28] sm:$0xf]
  %v272 = vld [vmem:[%s260 + $0x2c] sm:$0xf]
  %v273 = vld [vmem:[%s260 + $0x30] sm:$0xf]
  %v274 = vld [vmem:[%s260 + $0x34] sm:$0xf]
  %v275 = vld [vmem:[%s260 + $0x38] sm:$0xf]
  %v276 = vld [vmem:[%s260 + $0x3c] sm:$0xf]
  %s277 = scalar_lea.vmem %s3, 2
  %v278 = vld [vmem:[%s277] sm:$0x1]
  %v280 = vlaneseq
  %v281 = vshrl.u32 %v280, 7
  %v282 = vsub.s32 0, %v281
  %v283 = vrot.slane %v278, %v282
  %v301 = vunpack.c.l.b16 %v261
  %v302 = vunpack.c.l.b16 %v262
  %v303 = vunpack.c.l.b16 %v263
  %v304 = vunpack.c.l.b16 %v264
  %v305 = vunpack.c.l.b16 %v265
  %v306 = vunpack.c.l.b16 %v266
  %v307 = vunpack.c.l.b16 %v267
  %v308 = vunpack.c.l.b16 %v268
  %v309 = vunpack.c.l.b16 %v269
  %v310 = vunpack.c.l.b16 %v270
  %v311 = vunpack.c.l.b16 %v271
  %v312 = vunpack.c.l.b16 %v272
  %v313 = vunpack.c.l.b16 %v273
  %v314 = vunpack.c.l.b16 %v274
  %v315 = vunpack.c.l.b16 %v275
  %v316 = vunpack.c.l.b16 %v276
  %v317 = vpack.c.b16 %v302, %v301
  %v318 = vpack.c.b16 %v304, %v303
  %v319 = vpack.c.b16 %v306, %v305
  %v320 = vpack.c.b16 %v308, %v307
  %v321 = vpack.c.b16 %v310, %v309
  %v322 = vpack.c.b16 %v312, %v311
  %v323 = vpack.c.b16 %v314, %v313
  %v324 = vpack.c.b16 %v316, %v315
  %333 = vmatprep.subr.bf16.mxu0 0
  %334 = vmatpush1.bf16.msra.mxu0 %v324
  %335 = vmatprep.subr.bf16.mxu0 0
  %336 = vmatpush1.bf16.msra.mxu0 %v323
  %337 = vmatprep.subr.bf16.mxu0 0
  %338 = vmatpush1.bf16.msra.mxu0 %v322
  %339 = vmatprep.subr.bf16.mxu0 0
  %340 = vmatpush1.bf16.msra.mxu0 %v321
  %341 = vmatprep.subr.bf16.mxu0 0
  %342 = vmatpush1.bf16.msra.mxu0 %v320
  %343 = vmatprep.subr.bf16.mxu0 0
  %344 = vmatpush1.bf16.msra.mxu0 %v319
  %345 = vmatprep.subr.bf16.mxu0 0
  %346 = vmatpush1.bf16.msra.mxu0 %v318
  %347 = vmatprep.subr.bf16.mxu0 0
  %348 = vmatpush1.bf16.msra.mxu0 %v317
  %349 = vmatprep.subr.bf16.mxu0 0
  %350 = vmatpush2.bf16.msra.mxu0 0
  %351 = vmatprep.subr.bf16.mxu0 0
  %352 = vmatpush2.bf16.msra.mxu0 0
  %353 = vmatprep.subr.bf16.mxu0 0
  %354 = vmatpush2.bf16.msra.mxu0 0
  %355 = vmatprep.subr.bf16.mxu0 0
  %356 = vmatpush2.bf16.msra.mxu0 0
  %357 = vmatprep.subr.bf16.mxu0 0
  %358 = vmatpush2.bf16.msra.mxu0 0
  %359 = vmatprep.subr.bf16.mxu0 0
  %360 = vmatpush2.bf16.msra.mxu0 0
  %361 = vmatprep.subr.bf16.mxu0 0
  %362 = vmatpush2.bf16.msra.mxu0 0
  %363 = vmatprep.subr.bf16.mxu0 0
  %364 = vmatpush2.bf16.msra.mxu0 0
  %365 = vmatprep.mubr.bf16.mxu0 0
  %366 = vmatmul.mubr.bf16.gmra.mxu0 %v259
  %v367 = vpop.f32.mrf.mxu0
  %v368 = vadd.f32 %v283, %v367
  %v369 = vpop.f32.mrf.mxu0
  %v370 = vpop.f32.mrf.mxu0
  %v371 = vpop.f32.mrf.mxu0
  %372 = vdwg.mxu0
  %vm373 = vcmp.gt.f32.partialorder %v368, 0.0
  %v374 = vmin.f32 %v368, 0.0
  %v375 = vmul.f32 %v374, 1.442695
  %v376 = vpow.pop %v375
  %v377 = vsub.f32 %v376, 1.0
  %v378 = vsel %vm373, %v368, %v377
  %v379 = vpack.c.bf16 %v378, %v378
  %s380 = scalar_lea.vmem %s2, 192
  %v381 = vld [vmem:[%s380] sm:$0xf]
  %v382 = vld [vmem:[%s380 + $0x4] sm:$0xf]
  %v383 = vld [vmem:[%s380 + $0x8] sm:$0xf]
  %v384 = vld [vmem:[%s380 + $0xc] sm:$0xf]
  %v385 = vld [vmem:[%s380 + $0x10] sm:$0xf]
  %v386 = vld [vmem:[%s380 + $0x14] sm:$0xf]
  %v387 = vld [vmem:[%s380 + $0x18] sm:$0xf]
  %v388 = vld [vmem:[%s380 + $0x1c] sm:$0xf]
  %v389 = vld [vmem:[%s380 + $0x20] sm:$0xf]
  %v390 = vld [vmem:[%s380 + $0x24] sm:$0xf]
  %v391 = vld [vmem:[%s380 + $0x28] sm:$0xf]
  %v392 = vld [vmem:[%s380 + $0x2c] sm:$0xf]
  %v393 = vld [vmem:[%s380 + $0x30] sm:$0xf]
  %v394 = vld [vmem:[%s380 + $0x34] sm:$0xf]
  %v395 = vld [vmem:[%s380 + $0x38] sm:$0xf]
  %v396 = vld [vmem:[%s380 + $0x3c] sm:$0xf]
  %s397 = scalar_lea.vmem %s3, 3
  %v398 = vld [vmem:[%s397] sm:$0x1]
  %v400 = vlaneseq
  %v401 = vshrl.u32 %v400, 7
  %v402 = vsub.s32 0, %v401
  %v403 = vrot.slane %v398, %v402
  %v421 = vunpack.c.l.b16 %v381
  %v422 = vunpack.c.l.b16 %v382
  %v423 = vunpack.c.l.b16 %v383
  %v424 = vunpack.c.l.b16 %v384
  %v425 = vunpack.c.l.b16 %v385
  %v426 = vunpack.c.l.b16 %v386
  %v427 = vunpack.c.l.b16 %v387
  %v428 = vunpack.c.l.b16 %v388
  %v429 = vunpack.c.l.b16 %v389
  %v430 = vunpack.c.l.b16 %v390
  %v431 = vunpack.c.l.b16 %v391
  %v432 = vunpack.c.l.b16 %v392
  %v433 = vunpack.c.l.b16 %v393
  %v434 = vunpack.c.l.b16 %v394
  %v435 = vunpack.c.l.b16 %v395
  %v436 = vunpack.c.l.b16 %v396
  %v437 = vpack.c.b16 %v422, %v421
  %v438 = vpack.c.b16 %v424, %v423
  %v439 = vpack.c.b16 %v426, %v425
  %v440 = vpack.c.b16 %v428, %v427
  %v441 = vpack.c.b16 %v430, %v429
  %v442 = vpack.c.b16 %v432, %v431
  %v443 = vpack.c.b16 %v434, %v433
  %v444 = vpack.c.b16 %v436, %v435
  %453 = vmatprep.subr.bf16.mxu0 0
  %454 = vmatpush1.bf16.msra.mxu0 %v444
  %455 = vmatprep.subr.bf16.mxu0 0
  %456 = vmatpush1.bf16.msra.mxu0 %v443
  %457 = vmatprep.subr.bf16.mxu0 0
  %458 = vmatpush1.bf16.msra.mxu0 %v442
  %459 = vmatprep.subr.bf16.mxu0 0
  %460 = vmatpush1.bf16.msra.mxu0 %v441
  %461 = vmatprep.subr.bf16.mxu0 0
  %462 = vmatpush1.bf16.msra.mxu0 %v440
  %463 = vmatprep.subr.bf16.mxu0 0
  %464 = vmatpush1.bf16.msra.mxu0 %v439
  %465 = vmatprep.subr.bf16.mxu0 0
  %466 = vmatpush1.bf16.msra.mxu0 %v438
  %467 = vmatprep.subr.bf16.mxu0 0
  %468 = vmatpush1.bf16.msra.mxu0 %v437
  %469 = vmatprep.subr.bf16.mxu0 0
  %470 = vmatpush2.bf16.msra.mxu0 0
  %471 = vmatprep.subr.bf16.mxu0 0
  %472 = vmatpush2.bf16.msra.mxu0 0
  %473 = vmatprep.subr.bf16.mxu0 0
  %474 = vmatpush2.bf16.msra.mxu0 0
  %475 = vmatprep.subr.bf16.mxu0 0
  %476 = vmatpush2.bf16.msra.mxu0 0
  %477 = vmatprep.subr.bf16.mxu0 0
  %478 = vmatpush2.bf16.msra.mxu0 0
  %479 = vmatprep.subr.bf16.mxu0 0
  %480 = vmatpush2.bf16.msra.mxu0 0
  %481 = vmatprep.subr.bf16.mxu0 0
  %482 = vmatpush2.bf16.msra.mxu0 0
  %483 = vmatprep.subr.bf16.mxu0 0
  %484 = vmatpush2.bf16.msra.mxu0 0
  %485 = vmatprep.mubr.bf16.mxu0 0
  %486 = vmatmul.mubr.bf16.gmra.mxu0 %v379
  %v487 = vpop.f32.mrf.mxu0
  %v488 = vadd.f32 %v403, %v487
  %v489 = vpop.f32.mrf.mxu0
  %v490 = vpop.f32.mrf.mxu0
  %v491 = vpop.f32.mrf.mxu0
  %492 = vdwg.mxu0
  %493 = vst [vmem:[%s4] sm:$0xff] %v488
  %v494 = vlaneseq
  %v495 = vand.u32 %v494, 127
  %vm496 = vcmp.lt.s32.totalorder %v495, 16
  %v497 = vld [vmem:[%s1] sm:$0xff]
  %v498 = vmul.f32 %v488, 0.5
  %v499 = vmul.f32 %v498, 1.442695
  %v500 = vpow.pop %v499
  %v501 = vmul.f32 %v497, %v500
  %v502 = vsel %vm496, %v488, %v501
  %v503 = vpack.c.bf16 %v502, %v502
  %s504 = scalar_lea.vmem %s2, 256
  %v505 = vld [vmem:[%s504] sm:$0xf]
  %v506 = vld [vmem:[%s504 + $0x4] sm:$0xf]
  %v507 = vld [vmem:[%s504 + $0x8] sm:$0xf]
  %v508 = vld [vmem:[%s504 + $0xc] sm:$0xf]
  %v509 = vld [vmem:[%s504 + $0x10] sm:$0xf]
  %v510 = vld [vmem:[%s504 + $0x14] sm:$0xf]
  %v511 = vld [vmem:[%s504 + $0x18] sm:$0xf]
  %v512 = vld [vmem:[%s504 + $0x1c] sm:$0xf]
  %v513 = vld [vmem:[%s504 + $0x20] sm:$0xf]
  %v514 = vld [vmem:[%s504 + $0x24] sm:$0xf]
  %v515 = vld [vmem:[%s504 + $0x28] sm:$0xf]
  %v516 = vld [vmem:[%s504 + $0x2c] sm:$0xf]
  %v517 = vld [vmem:[%s504 + $0x30] sm:$0xf]
  %v518 = vld [vmem:[%s504 + $0x34] sm:$0xf]
  %v519 = vld [vmem:[%s504 + $0x38] sm:$0xf]
  %v520 = vld [vmem:[%s504 + $0x3c] sm:$0xf]
  %s521 = scalar_lea.vmem %s3, 4
  %v522 = vld [vmem:[%s521] sm:$0x1]
  %v524 = vlaneseq
  %v525 = vshrl.u32 %v524, 7
  %v526 = vsub.s32 0, %v525
  %v527 = vrot.slane %v522, %v526
  %v545 = vunpack.c.l.b16 %v505
  %v546 = vunpack.c.l.b16 %v506
  %v547 = vunpack.c.l.b16 %v507
  %v548 = vunpack.c.l.b16 %v508
  %v549 = vunpack.c.l.b16 %v509
  %v550 = vunpack.c.l.b16 %v510
  %v551 = vunpack.c.l.b16 %v511
  %v552 = vunpack.c.l.b16 %v512
  %v553 = vunpack.c.l.b16 %v513
  %v554 = vunpack.c.l.b16 %v514
  %v555 = vunpack.c.l.b16 %v515
  %v556 = vunpack.c.l.b16 %v516
  %v557 = vunpack.c.l.b16 %v517
  %v558 = vunpack.c.l.b16 %v518
  %v559 = vunpack.c.l.b16 %v519
  %v560 = vunpack.c.l.b16 %v520
  %v561 = vpack.c.b16 %v546, %v545
  %v562 = vpack.c.b16 %v548, %v547
  %v563 = vpack.c.b16 %v550, %v549
  %v564 = vpack.c.b16 %v552, %v551
  %v565 = vpack.c.b16 %v554, %v553
  %v566 = vpack.c.b16 %v556, %v555
  %v567 = vpack.c.b16 %v558, %v557
  %v568 = vpack.c.b16 %v560, %v559
  %577 = vmatprep.subr.bf16.mxu0 0
  %578 = vmatpush1.bf16.msra.mxu0 %v568
  %579 = vmatprep.subr.bf16.mxu0 0
  %580 = vmatpush1.bf16.msra.mxu0 %v567
  %581 = vmatprep.subr.bf16.mxu0 0
  %582 = vmatpush1.bf16.msra.mxu0 %v566
  %583 = vmatprep.subr.bf16.mxu0 0
  %584 = vmatpush1.bf16.msra.mxu0 %v565
  %585 = vmatprep.subr.bf16.mxu0 0
  %586 = vmatpush1.bf16.msra.mxu0 %v564
  %587 = vmatprep.subr.bf16.mxu0 0
  %588 = vmatpush1.bf16.msra.mxu0 %v563
  %589 = vmatprep.subr.bf16.mxu0 0
  %590 = vmatpush1.bf16.msra.mxu0 %v562
  %591 = vmatprep.subr.bf16.mxu0 0
  %592 = vmatpush1.bf16.msra.mxu0 %v561
  %593 = vmatprep.subr.bf16.mxu0 0
  %594 = vmatpush2.bf16.msra.mxu0 0
  %595 = vmatprep.subr.bf16.mxu0 0
  %596 = vmatpush2.bf16.msra.mxu0 0
  %597 = vmatprep.subr.bf16.mxu0 0
  %598 = vmatpush2.bf16.msra.mxu0 0
  %599 = vmatprep.subr.bf16.mxu0 0
  %600 = vmatpush2.bf16.msra.mxu0 0
  %601 = vmatprep.subr.bf16.mxu0 0
  %602 = vmatpush2.bf16.msra.mxu0 0
  %603 = vmatprep.subr.bf16.mxu0 0
  %604 = vmatpush2.bf16.msra.mxu0 0
  %605 = vmatprep.subr.bf16.mxu0 0
  %606 = vmatpush2.bf16.msra.mxu0 0
  %607 = vmatprep.subr.bf16.mxu0 0
  %608 = vmatpush2.bf16.msra.mxu0 0
  %609 = vmatprep.mubr.bf16.mxu0 0
  %610 = vmatmul.mubr.bf16.gmra.mxu0 %v503
  %v611 = vpop.f32.mrf.mxu0
  %v612 = vadd.f32 %v527, %v611
  %v613 = vpop.f32.mrf.mxu0
  %v614 = vpop.f32.mrf.mxu0
  %v615 = vpop.f32.mrf.mxu0
  %616 = vdwg.mxu0
  %vm617 = vcmp.gt.f32.partialorder %v612, 0.0
  %v618 = vmin.f32 %v612, 0.0
  %v619 = vmul.f32 %v618, 1.442695
  %v620 = vpow.pop %v619
  %v621 = vsub.f32 %v620, 1.0
  %v622 = vsel %vm617, %v612, %v621
  %v623 = vpack.c.bf16 %v622, %v622
  %s624 = scalar_lea.vmem %s2, 320
  %v625 = vld [vmem:[%s624] sm:$0xf]
  %v626 = vld [vmem:[%s624 + $0x4] sm:$0xf]
  %v627 = vld [vmem:[%s624 + $0x8] sm:$0xf]
  %v628 = vld [vmem:[%s624 + $0xc] sm:$0xf]
  %v629 = vld [vmem:[%s624 + $0x10] sm:$0xf]
  %v630 = vld [vmem:[%s624 + $0x14] sm:$0xf]
  %v631 = vld [vmem:[%s624 + $0x18] sm:$0xf]
  %v632 = vld [vmem:[%s624 + $0x1c] sm:$0xf]
  %v633 = vld [vmem:[%s624 + $0x20] sm:$0xf]
  %v634 = vld [vmem:[%s624 + $0x24] sm:$0xf]
  %v635 = vld [vmem:[%s624 + $0x28] sm:$0xf]
  %v636 = vld [vmem:[%s624 + $0x2c] sm:$0xf]
  %v637 = vld [vmem:[%s624 + $0x30] sm:$0xf]
  %v638 = vld [vmem:[%s624 + $0x34] sm:$0xf]
  %v639 = vld [vmem:[%s624 + $0x38] sm:$0xf]
  %v640 = vld [vmem:[%s624 + $0x3c] sm:$0xf]
  %s641 = scalar_lea.vmem %s3, 5
  %v642 = vld [vmem:[%s641] sm:$0x1]
  %v644 = vlaneseq
  %v645 = vshrl.u32 %v644, 7
  %v646 = vsub.s32 0, %v645
  %v647 = vrot.slane %v642, %v646
  %v665 = vunpack.c.l.b16 %v625
  %v666 = vunpack.c.l.b16 %v626
  %v667 = vunpack.c.l.b16 %v627
  %v668 = vunpack.c.l.b16 %v628
  %v669 = vunpack.c.l.b16 %v629
  %v670 = vunpack.c.l.b16 %v630
  %v671 = vunpack.c.l.b16 %v631
  %v672 = vunpack.c.l.b16 %v632
  %v673 = vunpack.c.l.b16 %v633
  %v674 = vunpack.c.l.b16 %v634
  %v675 = vunpack.c.l.b16 %v635
  %v676 = vunpack.c.l.b16 %v636
  %v677 = vunpack.c.l.b16 %v637
  %v678 = vunpack.c.l.b16 %v638
  %v679 = vunpack.c.l.b16 %v639
  %v680 = vunpack.c.l.b16 %v640
  %v681 = vpack.c.b16 %v666, %v665
  %v682 = vpack.c.b16 %v668, %v667
  %v683 = vpack.c.b16 %v670, %v669
  %v684 = vpack.c.b16 %v672, %v671
  %v685 = vpack.c.b16 %v674, %v673
  %v686 = vpack.c.b16 %v676, %v675
  %v687 = vpack.c.b16 %v678, %v677
  %v688 = vpack.c.b16 %v680, %v679
  %697 = vmatprep.subr.bf16.mxu0 0
  %698 = vmatpush1.bf16.msra.mxu0 %v688
  %699 = vmatprep.subr.bf16.mxu0 0
  %700 = vmatpush1.bf16.msra.mxu0 %v687
  %701 = vmatprep.subr.bf16.mxu0 0
  %702 = vmatpush1.bf16.msra.mxu0 %v686
  %703 = vmatprep.subr.bf16.mxu0 0
  %704 = vmatpush1.bf16.msra.mxu0 %v685
  %705 = vmatprep.subr.bf16.mxu0 0
  %706 = vmatpush1.bf16.msra.mxu0 %v684
  %707 = vmatprep.subr.bf16.mxu0 0
  %708 = vmatpush1.bf16.msra.mxu0 %v683
  %709 = vmatprep.subr.bf16.mxu0 0
  %710 = vmatpush1.bf16.msra.mxu0 %v682
  %711 = vmatprep.subr.bf16.mxu0 0
  %712 = vmatpush1.bf16.msra.mxu0 %v681
  %713 = vmatprep.subr.bf16.mxu0 0
  %714 = vmatpush2.bf16.msra.mxu0 0
  %715 = vmatprep.subr.bf16.mxu0 0
  %716 = vmatpush2.bf16.msra.mxu0 0
  %717 = vmatprep.subr.bf16.mxu0 0
  %718 = vmatpush2.bf16.msra.mxu0 0
  %719 = vmatprep.subr.bf16.mxu0 0
  %720 = vmatpush2.bf16.msra.mxu0 0
  %721 = vmatprep.subr.bf16.mxu0 0
  %722 = vmatpush2.bf16.msra.mxu0 0
  %723 = vmatprep.subr.bf16.mxu0 0
  %724 = vmatpush2.bf16.msra.mxu0 0
  %725 = vmatprep.subr.bf16.mxu0 0
  %726 = vmatpush2.bf16.msra.mxu0 0
  %727 = vmatprep.subr.bf16.mxu0 0
  %728 = vmatpush2.bf16.msra.mxu0 0
  %729 = vmatprep.mubr.bf16.mxu0 0
  %730 = vmatmul.mubr.bf16.gmra.mxu0 %v623
  %v731 = vpop.f32.mrf.mxu0
  %v732 = vadd.f32 %v647, %v731
  %v733 = vpop.f32.mrf.mxu0
  %v734 = vpop.f32.mrf.mxu0
  %v735 = vpop.f32.mrf.mxu0
  %736 = vdwg.mxu0
  %vm737 = vcmp.gt.f32.partialorder %v732, 0.0
  %v738 = vmin.f32 %v732, 0.0
  %v739 = vmul.f32 %v738, 1.442695
  %v740 = vpow.pop %v739
  %v741 = vsub.f32 %v740, 1.0
  %v742 = vsel %vm737, %v732, %v741
  %v743 = vpack.c.bf16 %v742, %v742
  %s744 = scalar_lea.vmem %s2, 384
  %v745 = vld [vmem:[%s744] sm:$0xf]
  %v746 = vld [vmem:[%s744 + $0x4] sm:$0xf]
  %v747 = vld [vmem:[%s744 + $0x8] sm:$0xf]
  %v748 = vld [vmem:[%s744 + $0xc] sm:$0xf]
  %v749 = vld [vmem:[%s744 + $0x10] sm:$0xf]
  %v750 = vld [vmem:[%s744 + $0x14] sm:$0xf]
  %v751 = vld [vmem:[%s744 + $0x18] sm:$0xf]
  %v752 = vld [vmem:[%s744 + $0x1c] sm:$0xf]
  %v753 = vld [vmem:[%s744 + $0x20] sm:$0xf]
  %v754 = vld [vmem:[%s744 + $0x24] sm:$0xf]
  %v755 = vld [vmem:[%s744 + $0x28] sm:$0xf]
  %v756 = vld [vmem:[%s744 + $0x2c] sm:$0xf]
  %v757 = vld [vmem:[%s744 + $0x30] sm:$0xf]
  %v758 = vld [vmem:[%s744 + $0x34] sm:$0xf]
  %v759 = vld [vmem:[%s744 + $0x38] sm:$0xf]
  %v760 = vld [vmem:[%s744 + $0x3c] sm:$0xf]
  %s761 = scalar_lea.vmem %s3, 6
  %v762 = vld [vmem:[%s761] sm:$0x1]
  %v764 = vlaneseq
  %v765 = vshrl.u32 %v764, 7
  %v766 = vsub.s32 0, %v765
  %v767 = vrot.slane %v762, %v766
  %v785 = vunpack.c.l.b16 %v745
  %v786 = vunpack.c.l.b16 %v746
  %v787 = vunpack.c.l.b16 %v747
  %v788 = vunpack.c.l.b16 %v748
  %v789 = vunpack.c.l.b16 %v749
  %v790 = vunpack.c.l.b16 %v750
  %v791 = vunpack.c.l.b16 %v751
  %v792 = vunpack.c.l.b16 %v752
  %v793 = vunpack.c.l.b16 %v753
  %v794 = vunpack.c.l.b16 %v754
  %v795 = vunpack.c.l.b16 %v755
  %v796 = vunpack.c.l.b16 %v756
  %v797 = vunpack.c.l.b16 %v757
  %v798 = vunpack.c.l.b16 %v758
  %v799 = vunpack.c.l.b16 %v759
  %v800 = vunpack.c.l.b16 %v760
  %v801 = vpack.c.b16 %v786, %v785
  %v802 = vpack.c.b16 %v788, %v787
  %v803 = vpack.c.b16 %v790, %v789
  %v804 = vpack.c.b16 %v792, %v791
  %v805 = vpack.c.b16 %v794, %v793
  %v806 = vpack.c.b16 %v796, %v795
  %v807 = vpack.c.b16 %v798, %v797
  %v808 = vpack.c.b16 %v800, %v799
  %817 = vmatprep.subr.bf16.mxu0 0
  %818 = vmatpush1.bf16.msra.mxu0 %v808
  %819 = vmatprep.subr.bf16.mxu0 0
  %820 = vmatpush1.bf16.msra.mxu0 %v807
  %821 = vmatprep.subr.bf16.mxu0 0
  %822 = vmatpush1.bf16.msra.mxu0 %v806
  %823 = vmatprep.subr.bf16.mxu0 0
  %824 = vmatpush1.bf16.msra.mxu0 %v805
  %825 = vmatprep.subr.bf16.mxu0 0
  %826 = vmatpush1.bf16.msra.mxu0 %v804
  %827 = vmatprep.subr.bf16.mxu0 0
  %828 = vmatpush1.bf16.msra.mxu0 %v803
  %829 = vmatprep.subr.bf16.mxu0 0
  %830 = vmatpush1.bf16.msra.mxu0 %v802
  %831 = vmatprep.subr.bf16.mxu0 0
  %832 = vmatpush1.bf16.msra.mxu0 %v801
  %833 = vmatprep.subr.bf16.mxu0 0
  %834 = vmatpush2.bf16.msra.mxu0 0
  %835 = vmatprep.subr.bf16.mxu0 0
  %836 = vmatpush2.bf16.msra.mxu0 0
  %837 = vmatprep.subr.bf16.mxu0 0
  %838 = vmatpush2.bf16.msra.mxu0 0
  %839 = vmatprep.subr.bf16.mxu0 0
  %840 = vmatpush2.bf16.msra.mxu0 0
  %841 = vmatprep.subr.bf16.mxu0 0
  %842 = vmatpush2.bf16.msra.mxu0 0
  %843 = vmatprep.subr.bf16.mxu0 0
  %844 = vmatpush2.bf16.msra.mxu0 0
  %845 = vmatprep.subr.bf16.mxu0 0
  %846 = vmatpush2.bf16.msra.mxu0 0
  %847 = vmatprep.subr.bf16.mxu0 0
  %848 = vmatpush2.bf16.msra.mxu0 0
  %849 = vmatprep.mubr.bf16.mxu0 0
  %850 = vmatmul.mubr.bf16.gmra.mxu0 %v743
  %v851 = vpop.f32.mrf.mxu0
  %v852 = vadd.f32 %v767, %v851
  %v853 = vpop.f32.mrf.mxu0
  %v854 = vpop.f32.mrf.mxu0
  %v855 = vpop.f32.mrf.mxu0
  %856 = vdwg.mxu0
  %vm857 = vcmp.gt.f32.partialorder %v852, 0.0
  %v858 = vmin.f32 %v852, 0.0
  %v859 = vmul.f32 %v858, 1.442695
  %v860 = vpow.pop %v859
  %v861 = vsub.f32 %v860, 1.0
  %v862 = vsel %vm857, %v852, %v861
  %v863 = vpack.c.bf16 %v862, %v862
  %s864 = scalar_lea.vmem %s2, 448
  %v865 = vld [vmem:[%s864] sm:$0xf]
  %v866 = vld [vmem:[%s864 + $0x4] sm:$0xf]
  %v867 = vld [vmem:[%s864 + $0x8] sm:$0xf]
  %v868 = vld [vmem:[%s864 + $0xc] sm:$0xf]
  %v869 = vld [vmem:[%s864 + $0x10] sm:$0xf]
  %v870 = vld [vmem:[%s864 + $0x14] sm:$0xf]
  %v871 = vld [vmem:[%s864 + $0x18] sm:$0xf]
  %v872 = vld [vmem:[%s864 + $0x1c] sm:$0xf]
  %v873 = vld [vmem:[%s864 + $0x20] sm:$0xf]
  %v874 = vld [vmem:[%s864 + $0x24] sm:$0xf]
  %v875 = vld [vmem:[%s864 + $0x28] sm:$0xf]
  %v876 = vld [vmem:[%s864 + $0x2c] sm:$0xf]
  %v877 = vld [vmem:[%s864 + $0x30] sm:$0xf]
  %v878 = vld [vmem:[%s864 + $0x34] sm:$0xf]
  %v879 = vld [vmem:[%s864 + $0x38] sm:$0xf]
  %v880 = vld [vmem:[%s864 + $0x3c] sm:$0xf]
  %s881 = scalar_lea.vmem %s3, 7
  %v882 = vld [vmem:[%s881] sm:$0x1]
  %v884 = vlaneseq
  %v885 = vshrl.u32 %v884, 7
  %v886 = vsub.s32 0, %v885
  %v887 = vrot.slane %v882, %v886
  %v905 = vunpack.c.l.b16 %v865
  %v906 = vunpack.c.l.b16 %v866
  %v907 = vunpack.c.l.b16 %v867
  %v908 = vunpack.c.l.b16 %v868
  %v909 = vunpack.c.l.b16 %v869
  %v910 = vunpack.c.l.b16 %v870
  %v911 = vunpack.c.l.b16 %v871
  %v912 = vunpack.c.l.b16 %v872
  %v913 = vunpack.c.l.b16 %v873
  %v914 = vunpack.c.l.b16 %v874
  %v915 = vunpack.c.l.b16 %v875
  %v916 = vunpack.c.l.b16 %v876
  %v917 = vunpack.c.l.b16 %v877
  %v918 = vunpack.c.l.b16 %v878
  %v919 = vunpack.c.l.b16 %v879
  %v920 = vunpack.c.l.b16 %v880
  %v921 = vpack.c.b16 %v906, %v905
  %v922 = vpack.c.b16 %v908, %v907
  %v923 = vpack.c.b16 %v910, %v909
  %v924 = vpack.c.b16 %v912, %v911
  %v925 = vpack.c.b16 %v914, %v913
  %v926 = vpack.c.b16 %v916, %v915
  %v927 = vpack.c.b16 %v918, %v917
  %v928 = vpack.c.b16 %v920, %v919
  %937 = vmatprep.subr.bf16.mxu0 0
  %938 = vmatpush1.bf16.msra.mxu0 %v928
  %939 = vmatprep.subr.bf16.mxu0 0
  %940 = vmatpush1.bf16.msra.mxu0 %v927
  %941 = vmatprep.subr.bf16.mxu0 0
  %942 = vmatpush1.bf16.msra.mxu0 %v926
  %943 = vmatprep.subr.bf16.mxu0 0
  %944 = vmatpush1.bf16.msra.mxu0 %v925
  %945 = vmatprep.subr.bf16.mxu0 0
  %946 = vmatpush1.bf16.msra.mxu0 %v924
  %947 = vmatprep.subr.bf16.mxu0 0
  %948 = vmatpush1.bf16.msra.mxu0 %v923
  %949 = vmatprep.subr.bf16.mxu0 0
  %950 = vmatpush1.bf16.msra.mxu0 %v922
  %951 = vmatprep.subr.bf16.mxu0 0
  %952 = vmatpush1.bf16.msra.mxu0 %v921
  %953 = vmatprep.subr.bf16.mxu0 0
  %954 = vmatpush2.bf16.msra.mxu0 0
  %955 = vmatprep.subr.bf16.mxu0 0
  %956 = vmatpush2.bf16.msra.mxu0 0
  %957 = vmatprep.subr.bf16.mxu0 0
  %958 = vmatpush2.bf16.msra.mxu0 0
  %959 = vmatprep.subr.bf16.mxu0 0
  %960 = vmatpush2.bf16.msra.mxu0 0
  %961 = vmatprep.subr.bf16.mxu0 0
  %962 = vmatpush2.bf16.msra.mxu0 0
  %963 = vmatprep.subr.bf16.mxu0 0
  %964 = vmatpush2.bf16.msra.mxu0 0
  %965 = vmatprep.subr.bf16.mxu0 0
  %966 = vmatpush2.bf16.msra.mxu0 0
  %967 = vmatprep.subr.bf16.mxu0 0
  %968 = vmatpush2.bf16.msra.mxu0 0
  %969 = vmatprep.mubr.bf16.mxu0 0
  %970 = vmatmul.mubr.bf16.gmra.mxu0 %v863
  %v971 = vpop.f32.mrf.mxu0
  %v972 = vadd.f32 %v887, %v971
  %v973 = vpop.f32.mrf.mxu0
  %v974 = vpop.f32.mrf.mxu0
  %v975 = vpop.f32.mrf.mxu0
  %976 = vdwg.mxu0
  %vm977 = vcmp.lt.s32.totalorder %v495, 64
  %v978 = vmax.f32 %v972, 0.0
  %vm979 = vcmp.ne.f32.partialorder %v972, %v972
  %v980 = vadd.f32 %v972, 0.0
  %v981 = vand.u32 2147483647, %v972
  %v982 = vsub.f32 0.0, %v981
  %v983 = vmul.f32 %v982, 1.442695
  %v984 = vpow.pop %v983
  %v985 = vadd.f32 %v984, 1.0
  %v986 = vlog2.pop %v985
  %v987 = vmul.f32 %v986, 0.6931472
  %v988 = vmul.f32 -0.5, %v984
  %v989 = vadd.f32 %v988, 1.0
  %v990 = vmul.f32 %v989, %v984
  %v991 = vand.u32 2147483647, %v984
  %vm992 = vcmp.lt.f32.partialorder %v991, 0.0004427343
  %v993 = vsel %vm992, %v990, %v987
  %v994 = vadd.f32 %v978, %v993
  %v995 = vsel %vm979, %v980, %v994
  %v996 = vsel %vm977, %v972, %v995
  %997 = vst [vmem:[%s5] sm:$0xff] %v996
  // Predicated region
  $region18: #{vae_bn_forward.1} parent=0 // pred_check
    _
  $region19: #{vae_bn_forward.1} parent=0 // pred_check_branch
    %999 = sbr.rel (0) target = $region21
  $region20: #{vae_bn_forward.1} parent=0 // pred_region
    _
  $region21: #{vae_bn_forward.1} parent=0 // pred_fallthru
    _
  // Predicated region
  $region22: #{vae_bn_forward.1} parent=0 // pred_check
    _
  $region23: #{vae_bn_forward.1} parent=0 // pred_check_branch
    %1001 = sbr.rel (0) target = $region25
  $region24: #{vae_bn_forward.1} parent=0 // pred_region
    _
  $region25: #{vae_bn_forward.1} parent=0 // pred_fallthru
    _
  // Predicated region
  $region26: #{vae_bn_forward.1} parent=0 // pred_check
    _
  $region27: #{vae_bn_forward.1} parent=0 // pred_check_branch
    %1003 = sbr.rel (0) target = $region29
  $region28: #{vae_bn_forward.1} parent=0 // pred_region
    _
  $region29: #{vae_bn_forward.1} parent=0 // pred_fallthru
    _
  // Predicated region
  $region30: #{vae_bn_forward.1} parent=0 // pred_check
    _
  $region31: #{vae_bn_forward.1} parent=0 // pred_check_branch
    %1005 = sbr.rel (0) target = $region33
  $region32: #{vae_bn_forward.1} parent=0 // pred_region
    _
  $region33: #{vae_bn_forward.1} parent=0 // pred_fallthru
    _

</llo_original>
